<compile_context>
chip_gen: v6e
topology: v6e:2x2x1
jax: 0.10.0
libtpu: 0.0.40
codegen_flags: <defaults>
</compile_context>

<pallas_src>
from functools import partial

import numpy as np
import jax
import jax.numpy as jnp
from jax.experimental import pallas as pl
from jax.experimental.pallas import tpu as pltpu


# ---------------------------------------------------------------------------
# skeleton_traits for the standard 2D image case (matches StyleGAN2 Upsample)
# ---------------------------------------------------------------------------
class SkeletonTraits2D:
    # kernel is multiplied by factor ** upfirdn_kernel_exp (2 spatial dims)
    upfirdn_kernel_exp = 2

    @staticmethod
    def reshape_1D_kernel(k):
        # separable 1D tap vector -> 2D outer-product kernel
        return k[None, :] * k[:, None]

    @staticmethod
    def upfirdn_pad(pad0, pad1):
        return (pad0, pad1)


def make_kernel(k, skeleton_traits=None):
    k = jnp.asarray(k, dtype=jnp.float32)
    if k.ndim == 1:
        k = skeleton_traits.reshape_1D_kernel(k)
    k = k / jnp.sum(k)
    return k


# ---------------------------------------------------------------------------
# trace-time polyphase tap tables
# ---------------------------------------------------------------------------
def _polyphase_taps(k2d, factor, pad0, pad1):
    """Per-output-phase taps for upfirdn2d(up=factor, down=1, pad=(pad0, pad1)).

    out[f*q + py, f*r + px] = sum_{(dy, dx, w) in phases[(py, px)]} w * x[q+dy, r+dx]
    (x read as zero outside [0,H) x [0,W)).  Returns (phases, halo).
    """
    k2d = np.asarray(k2d, dtype=np.float64)
    KH, KW = k2d.shape
    kf = k2d[::-1, ::-1]  # the reference correlates with the flipped kernel
    phases = {}
    offs_y, offs_x = [0], [0]
    for py in range(factor):
        rows = [(i, (py + i - pad0) // factor) for i in range(KH)
                if (py + i - pad0) % factor == 0]
        for px in range(factor):
            cols = [(j, (px + j - pad0) // factor) for j in range(KW)
                    if (px + j - pad0) % factor == 0]
            taps = []
            for i, dy in rows:
                for j, dx in cols:
                    w = float(kf[i, j])
                    if w != 0.0:
                        taps.append((dy, dx, w))
                        offs_y.append(dy)
                        offs_x.append(dx)
            phases[(py, px)] = taps
    halo = (max(0, -min(offs_y)), max(0, max(offs_y)),
            max(0, -min(offs_x)), max(0, max(offs_x)))
    return phases, halo


# ---------------------------------------------------------------------------
# in-register shift with zero fill (unambiguous semantics, no scratch, no mask)
# ---------------------------------------------------------------------------
def _shift(v, d, axis):
    """out[..., i, ...] = v[..., i + d, ...], zero outside the valid range."""
    if d == 0:
        return v
    size = v.shape[axis]
    zshape = list(v.shape)
    zshape[axis] = abs(d)
    zeros = jnp.zeros(zshape, v.dtype)
    idx = [slice(None)] * v.ndim
    if d > 0:
        idx[axis] = slice(d, size)
        return jnp.concatenate([v[tuple(idx)], zeros], axis=axis)
    idx[axis] = slice(0, size + d)
    return jnp.concatenate([zeros, v[tuple(idx)]], axis=axis)


# ---------------------------------------------------------------------------
# primary Pallas kernel: polyphase FIR with interleaved-row output
# ---------------------------------------------------------------------------
def _upfirdn_interleaved_kernel(x_ref, o_ref, *, phase_taps, H, W, f):
    # x_ref : (tc, H, W)         original (n, c) slices, native dtype
    # o_ref : (tc, H, f*f*W)     interleaved rows:
    #                            o[:, q, py*(f*W) + f*r + px] = out[:, f*q+py, f*r+px]
    x = x_ref[...]                                   # keep native dtype (bf16 ok)

    # Build each distinct shifted view once (in-register, no scratch); reuse it
    # across all phases.  dy (sublane) shifts are shared across dx shifts.
    yshift = {}
    views = {}
    for taps in phase_taps.values():
        for dy, dx, _ in taps:
            if dy not in yshift:
                yshift[dy] = _shift(x, dy, 1)
            if (dy, dx) not in views:
                views[(dy, dx)] = _shift(yshift[dy], dx, 2)

    for (py, px), taps in phase_taps.items():
        if not taps:
            acc = jnp.zeros(x.shape, jnp.float32)
        else:
            dy0, dx0, w0 = taps[0]                   # first tap initializes acc
            acc = views[(dy0, dx0)].astype(jnp.float32) * jnp.float32(w0)
            for dy, dx, w in taps[1:]:
                acc = acc + views[(dy, dx)].astype(jnp.float32) * jnp.float32(w)
        # static strided lane store: lanes py*f*W + px + f*k, k = 0..W-1
        o_ref[:, :, pl.ds(py * f * W + px, W, stride=f)] = acc.astype(o_ref.dtype)


# ---------------------------------------------------------------------------
# fallback Pallas kernel (compatibility path): phase planes + padded scratch
# ---------------------------------------------------------------------------
def _upfirdn_phase_plane_kernel(x_ref, o_ref, xp_ref, *, phase_taps, halo, H, W, f):
    # x_ref : (tc, H, W)        original (n, c) slices, native dtype
    # o_ref : (tc, f*f, H, W)   phase planes: o[:, py*f+px, q, r] = out[:, f*q+py, f*r+px]
    # xp_ref: (tc, Hp, Wp)      f32 scratch with a zero halo border
    hy_lo, hy_hi, hx_lo, hx_hi = halo

    @pl.when(pl.program_id(0) == 0)
    def _():
        # zero only once: scratch persists across grid steps and the interior
        # write below never touches the border rows/columns.
        xp_ref[...] = jnp.zeros(xp_ref.shape, jnp.float32)

    xp_ref[:, hy_lo:hy_lo + H, hx_lo:hx_lo + W] = x_ref[...].astype(jnp.float32)

    views = {}
    for taps in phase_taps.values():
        for dy, dx, _ in taps:
            if (dy, dx) not in views:
                views[(dy, dx)] = xp_ref[:, hy_lo + dy:hy_lo + dy + H,
                                         hx_lo + dx:hx_lo + dx + W]

    tc = o_ref.shape[0]
    for (py, px), taps in phase_taps.items():
        if not taps:
            o_ref[:, py * f + px, :, :] = jnp.zeros((tc, H, W), o_ref.dtype)
            continue
        dy0, dx0, w0 = taps[0]
        acc = views[(dy0, dx0)] * jnp.float32(w0)
        for dy, dx, w in taps[1:]:
            acc = acc + views[(dy, dx)] * jnp.float32(w)
        o_ref[:, py * f + px, :, :] = acc.astype(o_ref.dtype)


# ---------------------------------------------------------------------------
# Upsample module (forward pass) built around the Pallas kernels
# ---------------------------------------------------------------------------
class Upsample:
    def __init__(self, kernel, factor=2, skeleton_traits=None):
        self.skeleton_traits = skeleton_traits
        self.factor = factor
        k2d = make_kernel(kernel, skeleton_traits) * (
            factor ** skeleton_traits.upfirdn_kernel_exp)
        self.kernel = k2d  # registered-buffer equivalent
        p = k2d.shape[1] - factor
        pad0 = (p + 1) // 2 + factor - 1
        pad1 = p // 2
        self.pad = skeleton_traits.upfirdn_pad(pad0, pad1)
        # trace-time polyphase tables (4 taps / output pixel for a 4-tap blur)
        self._phase_taps, self._halo = _polyphase_taps(
            np.asarray(k2d), factor, pad0, pad1)
        self._n_views = len({(dy, dx) for taps in self._phase_taps.values()
                             for (dy, dx, _) in taps})

    def forward(self, x):
        return self.__call__(x)

    def __call__(self, x):
        N, C, H, W = x.shape
        f = self.factor
        pad0, pad1 = self.pad
        KH, KW = self.kernel.shape
        h_out = H * f + pad0 + pad1 - KH + 1
        w_out = W * f + pad0 + pad1 - KW + 1
        assert h_out == f * H and w_out == f * W, (
            "polyphase path assumes the Upsample pad formula (out = factor * in)")

        B = N * C
        xf = x.reshape(B, H, W)          # native dtype -> native-width DMA (bf16 ok)
        isz = jnp.dtype(x.dtype).itemsize

        # ---- VMEM budget: derive from chip capacity, include live intermediates ----
        try:
            vmem_cap = int(getattr(pltpu.get_tpu_info(), "vmem_capacity_bytes",
                                   64 * 1024 * 1024))
        except Exception:
            vmem_cap = 64 * 1024 * 1024            # conservative (v7x-sized) default
        vmem_limit = int(min(max(vmem_cap * 3 // 4, 16 * 1024 * 1024),
                             96 * 1024 * 1024))
        budget = vmem_limit // 2                   # headroom for compiler scratch

        per_slice = (
            2 * H * W * isz                        # double-buffered input block
            + 2 * H * f * f * W * isz              # double-buffered output block
            + (self._n_views + 1) * H * W * isz    # in-register shifted views
            + (f * f + 1) * H * W * 4              # f32 accumulators / temporaries
        )

        tc_fit = 1
        for cand in (256, 128, 64, 32, 16, 8, 4, 2, 1):
            if cand * per_slice <= budget:
                tc_fit = cand
                break
        tc = max(1, min(tc_fit, B))
        # prefer an exact divisor of B (avoids tail padding) unless it is < tc/2
        for cand in range(tc, 0, -1):
            if B % cand == 0:
                if 2 * cand >= tc:
                    tc = cand
                break
        Bp = int(pl.cdiv(B, tc)) * tc
        if Bp != B:
            xf = jnp.pad(xf, ((0, Bp - B), (0, 0), (0, 0)))   # zero tail slices

        cparams = pltpu.CompilerParams(
            dimension_semantics=("parallel",),   # TODO(synk): CORE_PARALLEL on v7x
            vmem_limit_bytes=vmem_limit,
        )

        try:
            kern = partial(_upfirdn_interleaved_kernel,
                           phase_taps=self._phase_taps, H=H, W=W, f=f)
            phases = pl.pallas_call(
                kern,
                out_shape=jax.ShapeDtypeStruct((Bp, H, f * f * W), x.dtype),
                grid=(Bp // tc,),
                in_specs=[pl.BlockSpec((tc, H, W), lambda b: (b, 0, 0))],
                out_specs=pl.BlockSpec((tc, H, f * f * W), lambda b: (b, 0, 0)),
                compiler_params=cparams,
            )(xf)
            phases = jax.block_until_ready(phases)
            # lane index is py*(f*W) + f*x + px, so a contiguous (free) reshape
            # already yields the interleaved (N, C, f*H, f*W) output.
            return phases[:B].reshape(N, C, f * H, f * W)
        except Exception:
            # Compatibility fallback: phase-plane kernel + XLA recombine (slower:
            # one extra HBM pass for the transpose), used only if this Mosaic
            # build cannot lower strided stores / unaligned value concatenation.
            hy_lo, hy_hi, hx_lo, hx_hi = self._halo
            Hp, Wp = H + hy_lo + hy_hi, W + hx_lo + hx_hi
            kern = partial(_upfirdn_phase_plane_kernel,
                           phase_taps=self._phase_taps, halo=self._halo,
                           H=H, W=W, f=f)
            planes = pl.pallas_call(
                kern,
                out_shape=jax.ShapeDtypeStruct((Bp, f * f, H, W), x.dtype),
                grid=(Bp // tc,),
                in_specs=[pl.BlockSpec((tc, H, W), lambda b: (b, 0, 0))],
                out_specs=pl.BlockSpec((tc, f * f, H, W), lambda b: (b, 0, 0, 0)),
                scratch_shapes=[pltpu.VMEM((tc, Hp, Wp), jnp.float32)],
                compiler_params=cparams,
            )(xf)
            planes = planes[:B].reshape(N, C, f, f, H, W)
            out = planes.transpose(0, 1, 4, 2, 5, 3)
            return out.reshape(N, C, f * H, f * W)


# ---------------------------------------------------------------------------
# pure NumPy (float64) reference of torch's upfirdn2d(up=factor, down=1, pad)
# ---------------------------------------------------------------------------
def _reference_upfirdn_upsample(x, k2d, factor, pad):
    x = np.asarray(x, np.float64)
    k = np.asarray(k2d, np.float64)
    N, C, H, W = x.shape
    f = factor
    pad0, pad1 = pad
    KH, KW = k.shape
    z = np.zeros((N, C, H * f, W * f), np.float64)
    z[:, :, ::f, ::f] = x                              # zero-stuff (up=f)
    zp = np.pad(z, ((0, 0), (0, 0), (pad0, pad1), (pad0, pad1)))
    kf = k[::-1, ::-1]                                 # conv2d == correlate w/ flip
    Ho = H * f + pad0 + pad1 - KH + 1
    Wo = W * f + pad0 + pad1 - KW + 1
    out = np.zeros((N, C, Ho, Wo), np.float64)
    for i in range(KH):
        for j in range(KW):
            out += kf[i, j] * zp[:, :, i:i + Ho, j:j + Wo]
    return out


if __name__ == "__main__":
    key = jax.random.PRNGKey(0)
    N, C, H, W = 2, 4, 16, 16
    x = jax.random.normal(key, (N, C, H, W), dtype=jnp.float32)

    traits = SkeletonTraits2D()
    up = Upsample(kernel=[1, 3, 3, 1], factor=2, skeleton_traits=traits)

    out = jax.block_until_ready(up(x))
    ref = _reference_upfirdn_upsample(np.asarray(x), np.asarray(up.kernel),
                                      up.factor, up.pad)

    assert out.shape == (N, C, 2 * H, 2 * W), out.shape
    assert np.allclose(np.asarray(out, np.float64), ref, rtol=1e-5, atol=1e-5), (
        "Pallas polyphase upfirdn2d upsample mismatch vs NumPy reference")
    print("KERNEL_OK")
</pallas_src>

<mosaic_0001>
module attributes {stable_mosaic.version = 11 : i64} {
  func.func @_upfirdn_interleaved_kernel(%arg0: i32, %arg1: memref<8x16x16xf32, #tpu.memory_space<vmem>>, %arg2: memref<8x16x64xf32, #tpu.memory_space<vmem>>) attributes {dimension_semantics = [#tpu.dimension_semantics<parallel>], iteration_bounds = array<i64: 1>, scalar_prefetch = 0 : i64, scratch_operands = 0 : i64, tpu.core_type = #tpu.core_type<tc>, window_params = [{transform_indices = @transform_0, window_bounds = array<i64: 8, 16, 16>}, {transform_indices = @transform_1, window_bounds = array<i64: 8, 16, 64>}]} {
    %c0 = arith.constant 0 : index
    %c0_0 = arith.constant 0 : index
    %c0_1 = arith.constant 0 : index
    %0 = vector.load %arg1[%c0, %c0_0, %c0_1] : memref<8x16x16xf32, #tpu.memory_space<vmem>>, vector<8x16x16xf32>
    %cst = arith.constant 0.000000e+00 : f32
    %1 = vector.broadcast %cst : f32 to vector<8x1x16xf32>
    %2 = vector.extract_strided_slice %0 {offsets = [0, 0, 0], sizes = [8, 15, 16], strides = [1, 1, 1]} : vector<8x16x16xf32> to vector<8x15x16xf32>
    %3 = tpu.concatenate %1, %2 in 1 : vector<8x1x16xf32>, vector<8x15x16xf32> -> vector<8x16x16xf32>
    %cst_2 = arith.constant 0.000000e+00 : f32
    %4 = vector.broadcast %cst_2 : f32 to vector<8x16x1xf32>
    %5 = vector.extract_strided_slice %3 {offsets = [0, 0, 0], sizes = [8, 16, 15], strides = [1, 1, 1]} : vector<8x16x16xf32> to vector<8x16x15xf32>
    %6 = tpu.concatenate %4, %5 in 2 : vector<8x16x1xf32>, vector<8x16x15xf32> -> vector<8x16x16xf32>
    %cst_3 = arith.constant 0.000000e+00 : f32
    %7 = vector.broadcast %cst_3 : f32 to vector<8x16x1xf32>
    %8 = vector.extract_strided_slice %0 {offsets = [0, 0, 0], sizes = [8, 16, 15], strides = [1, 1, 1]} : vector<8x16x16xf32> to vector<8x16x15xf32>
    %9 = tpu.concatenate %7, %8 in 2 : vector<8x16x1xf32>, vector<8x16x15xf32> -> vector<8x16x16xf32>
    %cst_4 = arith.constant 0.000000e+00 : f32
    %10 = vector.broadcast %cst_4 : f32 to vector<8x16x1xf32>
    %11 = vector.extract_strided_slice %3 {offsets = [0, 0, 1], sizes = [8, 16, 15], strides = [1, 1, 1]} : vector<8x16x16xf32> to vector<8x16x15xf32>
    %12 = tpu.concatenate %11, %10 in 2 : vector<8x16x15xf32>, vector<8x16x1xf32> -> vector<8x16x16xf32>
    %cst_5 = arith.constant 0.000000e+00 : f32
    %13 = vector.broadcast %cst_5 : f32 to vector<8x16x1xf32>
    %14 = vector.extract_strided_slice %0 {offsets = [0, 0, 1], sizes = [8, 16, 15], strides = [1, 1, 1]} : vector<8x16x16xf32> to vector<8x16x15xf32>
    %15 = tpu.concatenate %14, %13 in 2 : vector<8x16x15xf32>, vector<8x16x1xf32> -> vector<8x16x16xf32>
    %cst_6 = arith.constant 0.000000e+00 : f32
    %16 = vector.broadcast %cst_6 : f32 to vector<8x1x16xf32>
    %17 = vector.extract_strided_slice %0 {offsets = [0, 1, 0], sizes = [8, 15, 16], strides = [1, 1, 1]} : vector<8x16x16xf32> to vector<8x15x16xf32>
    %18 = tpu.concatenate %17, %16 in 1 : vector<8x15x16xf32>, vector<8x1x16xf32> -> vector<8x16x16xf32>
    %cst_7 = arith.constant 0.000000e+00 : f32
    %19 = vector.broadcast %cst_7 : f32 to vector<8x16x1xf32>
    %20 = vector.extract_strided_slice %18 {offsets = [0, 0, 0], sizes = [8, 16, 15], strides = [1, 1, 1]} : vector<8x16x16xf32> to vector<8x16x15xf32>
    %21 = tpu.concatenate %19, %20 in 2 : vector<8x16x1xf32>, vector<8x16x15xf32> -> vector<8x16x16xf32>
    %cst_8 = arith.constant 0.000000e+00 : f32
    %22 = vector.broadcast %cst_8 : f32 to vector<8x16x1xf32>
    %23 = vector.extract_strided_slice %18 {offsets = [0, 0, 1], sizes = [8, 16, 15], strides = [1, 1, 1]} : vector<8x16x16xf32> to vector<8x16x15xf32>
    %24 = tpu.concatenate %23, %22 in 2 : vector<8x16x15xf32>, vector<8x16x1xf32> -> vector<8x16x16xf32>
    %cst_9 = arith.constant 6.250000e-02 : f32
    %25 = vector.broadcast %cst_9 : f32 to vector<8x16x16xf32>
    %26 = arith.mulf %6, %25 : vector<8x16x16xf32>
    %cst_10 = arith.constant 1.875000e-01 : f32
    %27 = vector.broadcast %cst_10 : f32 to vector<8x16x16xf32>
    %28 = arith.mulf %3, %27 : vector<8x16x16xf32>
    %29 = arith.addf %26, %28 : vector<8x16x16xf32>
    %cst_11 = arith.constant 1.875000e-01 : f32
    %30 = vector.broadcast %cst_11 : f32 to vector<8x16x16xf32>
    %31 = arith.mulf %9, %30 : vector<8x16x16xf32>
    %32 = arith.addf %29, %31 : vector<8x16x16xf32>
    %cst_12 = arith.constant 5.625000e-01 : f32
    %33 = vector.broadcast %cst_12 : f32 to vector<8x16x16xf32>
    %34 = arith.mulf %0, %33 : vector<8x16x16xf32>
    %35 = arith.addf %32, %34 : vector<8x16x16xf32>
    %c0_13 = arith.constant 0 : index
    %c0_14 = arith.constant 0 : index
    %c0_15 = arith.constant 0 : index
    %36 = tpu.strided_load %arg2[%c0_13, %c0_14, %c0_15] {strides = array<i32: 1, 1, 2>} : memref<8x16x64xf32, #tpu.memory_space<vmem>>, vector<8x16x16xf32>
    tpu.strided_store %arg2[%c0_13, %c0_14, %c0_15], %35 {strides = array<i32: 1, 1, 2>} : memref<8x16x64xf32, #tpu.memory_space<vmem>>, vector<8x16x16xf32>
    %cst_16 = arith.constant 1.875000e-01 : f32
    %37 = vector.broadcast %cst_16 : f32 to vector<8x16x16xf32>
    %38 = arith.mulf %3, %37 : vector<8x16x16xf32>
    %cst_17 = arith.constant 6.250000e-02 : f32
    %39 = vector.broadcast %cst_17 : f32 to vector<8x16x16xf32>
    %40 = arith.mulf %12, %39 : vector<8x16x16xf32>
    %41 = arith.addf %38, %40 : vector<8x16x16xf32>
    %cst_18 = arith.constant 5.625000e-01 : f32
    %42 = vector.broadcast %cst_18 : f32 to vector<8x16x16xf32>
    %43 = arith.mulf %0, %42 : vector<8x16x16xf32>
    %44 = arith.addf %41, %43 : vector<8x16x16xf32>
    %cst_19 = arith.constant 1.875000e-01 : f32
    %45 = vector.broadcast %cst_19 : f32 to vector<8x16x16xf32>
    %46 = arith.mulf %15, %45 : vector<8x16x16xf32>
    %47 = arith.addf %44, %46 : vector<8x16x16xf32>
    %c0_20 = arith.constant 0 : index
    %c0_21 = arith.constant 0 : index
    %c1 = arith.constant 1 : index
    %48 = tpu.strided_load %arg2[%c0_20, %c0_21, %c1] {strides = array<i32: 1, 1, 2>} : memref<8x16x64xf32, #tpu.memory_space<vmem>>, vector<8x16x16xf32>
    tpu.strided_store %arg2[%c0_20, %c0_21, %c1], %47 {strides = array<i32: 1, 1, 2>} : memref<8x16x64xf32, #tpu.memory_space<vmem>>, vector<8x16x16xf32>
    %cst_22 = arith.constant 1.875000e-01 : f32
    %49 = vector.broadcast %cst_22 : f32 to vector<8x16x16xf32>
    %50 = arith.mulf %9, %49 : vector<8x16x16xf32>
    %cst_23 = arith.constant 5.625000e-01 : f32
    %51 = vector.broadcast %cst_23 : f32 to vector<8x16x16xf32>
    %52 = arith.mulf %0, %51 : vector<8x16x16xf32>
    %53 = arith.addf %50, %52 : vector<8x16x16xf32>
    %cst_24 = arith.constant 6.250000e-02 : f32
    %54 = vector.broadcast %cst_24 : f32 to vector<8x16x16xf32>
    %55 = arith.mulf %21, %54 : vector<8x16x16xf32>
    %56 = arith.addf %53, %55 : vector<8x16x16xf32>
    %cst_25 = arith.constant 1.875000e-01 : f32
    %57 = vector.broadcast %cst_25 : f32 to vector<8x16x16xf32>
    %58 = arith.mulf %18, %57 : vector<8x16x16xf32>
    %59 = arith.addf %56, %58 : vector<8x16x16xf32>
    %c0_26 = arith.constant 0 : index
    %c0_27 = arith.constant 0 : index
    %c32 = arith.constant 32 : index
    %60 = tpu.strided_load %arg2[%c0_26, %c0_27, %c32] {strides = array<i32: 1, 1, 2>} : memref<8x16x64xf32, #tpu.memory_space<vmem>>, vector<8x16x16xf32>
    tpu.strided_store %arg2[%c0_26, %c0_27, %c32], %59 {strides = array<i32: 1, 1, 2>} : memref<8x16x64xf32, #tpu.memory_space<vmem>>, vector<8x16x16xf32>
    %cst_28 = arith.constant 5.625000e-01 : f32
    %61 = vector.broadcast %cst_28 : f32 to vector<8x16x16xf32>
    %62 = arith.mulf %0, %61 : vector<8x16x16xf32>
    %cst_29 = arith.constant 1.875000e-01 : f32
    %63 = vector.broadcast %cst_29 : f32 to vector<8x16x16xf32>
    %64 = arith.mulf %15, %63 : vector<8x16x16xf32>
    %65 = arith.addf %62, %64 : vector<8x16x16xf32>
    %cst_30 = arith.constant 1.875000e-01 : f32
    %66 = vector.broadcast %cst_30 : f32 to vector<8x16x16xf32>
    %67 = arith.mulf %18, %66 : vector<8x16x16xf32>
    %68 = arith.addf %65, %67 : vector<8x16x16xf32>
    %cst_31 = arith.constant 6.250000e-02 : f32
    %69 = vector.broadcast %cst_31 : f32 to vector<8x16x16xf32>
    %70 = arith.mulf %24, %69 : vector<8x16x16xf32>
    %71 = arith.addf %68, %70 : vector<8x16x16xf32>
    %c0_32 = arith.constant 0 : index
    %c0_33 = arith.constant 0 : index
    %c33 = arith.constant 33 : index
    %72 = tpu.strided_load %arg2[%c0_32, %c0_33, %c33] {strides = array<i32: 1, 1, 2>} : memref<8x16x64xf32, #tpu.memory_space<vmem>>, vector<8x16x16xf32>
    tpu.strided_store %arg2[%c0_32, %c0_33, %c33], %71 {strides = array<i32: 1, 1, 2>} : memref<8x16x64xf32, #tpu.memory_space<vmem>>, vector<8x16x16xf32>
    return
  }
  func.func @transform_0(%arg0: i32) -> (i32, i32, i32) {
    %c0_i32 = arith.constant 0 : i32
    %c0_i32_0 = arith.constant 0 : i32
    %c0_i32_1 = arith.constant 0 : i32
    return %arg0, %c0_i32, %c0_i32_0 : i32, i32, i32
  }
  func.func @transform_1(%arg0: i32) -> (i32, i32, i32) {
    %c0_i32 = arith.constant 0 : i32
    %c0_i32_0 = arith.constant 0 : i32
    %c0_i32_1 = arith.constant 0 : i32
    return %arg0, %c0_i32, %c0_i32_0 : i32, i32, i32
  }
}

module attributes {stable_mosaic.version = 11 : i64} {
  func.func @_upfirdn_phase_plane_kernel(%arg0: i32, %arg1: memref<8x16x16xf32, #tpu.memory_space<vmem>>, %arg2: memref<8x4x16x16xf32, #tpu.memory_space<vmem>>, %arg3: memref<8x18x18xf32, #tpu.memory_space<vmem>>) attributes {dimension_semantics = [#tpu.dimension_semantics<parallel>], iteration_bounds = array<i64: 1>, scalar_prefetch = 0 : i64, scratch_operands = 1 : i64, tpu.core_type = #tpu.core_type<tc>, window_params = [{transform_indices = @transform_0, window_bounds = array<i64: 8, 16, 16>}, {transform_indices = @transform_1, window_bounds = array<i64: 8, 4, 16, 16>}]} {
    %c0_i32 = arith.constant 0 : i32
    %0 = arith.cmpi eq, %arg0, %c0_i32 : i32
    %1 = arith.extui %0 : i1 to i32
    %c0_i32_0 = arith.constant 0 : i32
    %2 = arith.cmpi ne, %1, %c0_i32_0 : i32
    scf.if %2 {
      %cst_61 = arith.constant 0.000000e+00 : f32
      %70 = vector.broadcast %cst_61 : f32 to vector<8x18x18xf32>
      %c0_62 = arith.constant 0 : index
      %c0_63 = arith.constant 0 : index
      %c0_64 = arith.constant 0 : index
      %71 = vector.load %arg3[%c0_62, %c0_63, %c0_64] : memref<8x18x18xf32, #tpu.memory_space<vmem>>, vector<8x18x18xf32>
      tpu.vector_store %arg3[%c0_62, %c0_63, %c0_64], %70 {strides = array<i32>} : memref<8x18x18xf32, #tpu.memory_space<vmem>>, vector<8x18x18xf32>,
    } else {
    }
    %c0 = arith.constant 0 : index
    %c0_1 = arith.constant 0 : index
    %c0_2 = arith.constant 0 : index
    %3 = vector.load %arg1[%c0, %c0_1, %c0_2] : memref<8x16x16xf32, #tpu.memory_space<vmem>>, vector<8x16x16xf32>
    %c0_3 = arith.constant 0 : index
    %c1 = arith.constant 1 : index
    %c1_4 = arith.constant 1 : index
    %4 = vector.load %arg3[%c0_3, %c1, %c1_4] : memref<8x18x18xf32, #tpu.memory_space<vmem>>, vector<8x16x16xf32>
    tpu.vector_store %arg3[%c0_3, %c1, %c1_4], %3 {strides = array<i32>} : memref<8x18x18xf32, #tpu.memory_space<vmem>>, vector<8x16x16xf32>,
    %c0_5 = arith.constant 0 : index
    %c0_6 = arith.constant 0 : index
    %c0_7 = arith.constant 0 : index
    %5 = vector.load %arg3[%c0_5, %c0_6, %c0_7] : memref<8x18x18xf32, #tpu.memory_space<vmem>>, vector<8x16x16xf32>
    %c0_8 = arith.constant 0 : index
    %c0_9 = arith.constant 0 : index
    %c1_10 = arith.constant 1 : index
    %6 = vector.load %arg3[%c0_8, %c0_9, %c1_10] : memref<8x18x18xf32, #tpu.memory_space<vmem>>, vector<8x16x16xf32>
    %c0_11 = arith.constant 0 : index
    %c1_12 = arith.constant 1 : index
    %c0_13 = arith.constant 0 : index
    %7 = vector.load %arg3[%c0_11, %c1_12, %c0_13] : memref<8x18x18xf32, #tpu.memory_space<vmem>>, vector<8x16x16xf32>
    %c0_14 = arith.constant 0 : index
    %c1_15 = arith.constant 1 : index
    %c1_16 = arith.constant 1 : index
    %8 = vector.load %arg3[%c0_14, %c1_15, %c1_16] : memref<8x18x18xf32, #tpu.memory_space<vmem>>, vector<8x16x16xf32>
    %c0_17 = arith.constant 0 : index
    %c0_18 = arith.constant 0 : index
    %c2 = arith.constant 2 : index
    %9 = vector.load %arg3[%c0_17, %c0_18, %c2] : memref<8x18x18xf32, #tpu.memory_space<vmem>>, vector<8x16x16xf32>
    %c0_19 = arith.constant 0 : index
    %c1_20 = arith.constant 1 : index
    %c2_21 = arith.constant 2 : index
    %10 = vector.load %arg3[%c0_19, %c1_20, %c2_21] : memref<8x18x18xf32, #tpu.memory_space<vmem>>, vector<8x16x16xf32>
    %c0_22 = arith.constant 0 : index
    %c2_23 = arith.constant 2 : index
    %c0_24 = arith.constant 0 : index
    %11 = vector.load %arg3[%c0_22, %c2_23, %c0_24] : memref<8x18x18xf32, #tpu.memory_space<vmem>>, vector<8x16x16xf32>
    %c0_25 = arith.constant 0 : index
    %c2_26 = arith.constant 2 : index
    %c1_27 = arith.constant 1 : index
    %12 = vector.load %arg3[%c0_25, %c2_26, %c1_27] : memref<8x18x18xf32, #tpu.memory_space<vmem>>, vector<8x16x16xf32>
    %c0_28 = arith.constant 0 : index
    %c2_29 = arith.constant 2 : index
    %c2_30 = arith.constant 2 : index
    %13 = vector.load %arg3[%c0_28, %c2_29, %c2_30] : memref<8x18x18xf32, #tpu.memory_space<vmem>>, vector<8x16x16xf32>
    %cst = arith.constant 6.250000e-02 : f32
    %14 = vector.broadcast %cst : f32 to vector<8x16x16xf32>
    %15 = arith.mulf %5, %14 : vector<8x16x16xf32>
    %cst_31 = arith.constant 1.875000e-01 : f32
    %16 = vector.broadcast %cst_31 : f32 to vector<8x16x16xf32>
    %17 = arith.mulf %6, %16 : vector<8x16x16xf32>
    %18 = arith.addf %15, %17 : vector<8x16x16xf32>
    %cst_32 = arith.constant 1.875000e-01 : f32
    %19 = vector.broadcast %cst_32 : f32 to vector<8x16x16xf32>
    %20 = arith.mulf %7, %19 : vector<8x16x16xf32>
    %21 = arith.addf %18, %20 : vector<8x16x16xf32>
    %cst_33 = arith.constant 5.625000e-01 : f32
    %22 = vector.broadcast %cst_33 : f32 to vector<8x16x16xf32>
    %23 = arith.mulf %8, %22 : vector<8x16x16xf32>
    %24 = arith.addf %21, %23 : vector<8x16x16xf32>
    %c0_34 = arith.constant 0 : index
    %c0_35 = arith.constant 0 : index
    %c0_36 = arith.constant 0 : index
    %c0_37 = arith.constant 0 : index
    %25 = vector.load %arg2[%c0_34, %c0_35, %c0_36, %c0_37] : memref<8x4x16x16xf32, #tpu.memory_space<vmem>>, vector<8x1x16x16xf32>
    %26 = vector.shape_cast %25 : vector<8x1x16x16xf32> to vector<8x16x16xf32>
    %27 = vector.shape_cast %24 : vector<8x16x16xf32> to vector<8x1x16x16xf32>
    tpu.vector_store %arg2[%c0_34, %c0_35, %c0_36, %c0_37], %27 {strides = array<i32>} : memref<8x4x16x16xf32, #tpu.memory_space<vmem>>, vector<8x1x16x16xf32>,
    %cst_38 = arith.constant 1.875000e-01 : f32
    %28 = vector.broadcast %cst_38 : f32 to vector<8x16x16xf32>
    %29 = arith.mulf %6, %28 : vector<8x16x16xf32>
    %cst_39 = arith.constant 6.250000e-02 : f32
    %30 = vector.broadcast %cst_39 : f32 to vector<8x16x16xf32>
    %31 = arith.mulf %9, %30 : vector<8x16x16xf32>
    %32 = arith.addf %29, %31 : vector<8x16x16xf32>
    %cst_40 = arith.constant 5.625000e-01 : f32
    %33 = vector.broadcast %cst_40 : f32 to vector<8x16x16xf32>
    %34 = arith.mulf %8, %33 : vector<8x16x16xf32>
    %35 = arith.addf %32, %34 : vector<8x16x16xf32>
    %cst_41 = arith.constant 1.875000e-01 : f32
    %36 = vector.broadcast %cst_41 : f32 to vector<8x16x16xf32>
    %37 = arith.mulf %10, %36 : vector<8x16x16xf32>
    %38 = arith.addf %35, %37 : vector<8x16x16xf32>
    %c0_42 = arith.constant 0 : index
    %c1_43 = arith.constant 1 : index
    %c0_44 = arith.constant 0 : index
    %c0_45 = arith.constant 0 : index
    %39 = vector.load %arg2[%c0_42, %c1_43, %c0_44, %c0_45] : memref<8x4x16x16xf32, #tpu.memory_space<vmem>>, vector<8x1x16x16xf32>
    %40 = vector.shape_cast %39 : vector<8x1x16x16xf32> to vector<8x16x16xf32>
    %41 = vector.shape_cast %38 : vector<8x16x16xf32> to vector<8x1x16x16xf32>
    tpu.vector_store %arg2[%c0_42, %c1_43, %c0_44, %c0_45], %41 {strides = array<i32>} : memref<8x4x16x16xf32, #tpu.memory_space<vmem>>, vector<8x1x16x16xf32>,
    %cst_46 = arith.constant 1.875000e-01 : f32
    %42 = vector.broadcast %cst_46 : f32 to vector<8x16x16xf32>
    %43 = arith.mulf %7, %42 : vector<8x16x16xf32>
    %cst_47 = arith.constant 5.625000e-01 : f32
    %44 = vector.broadcast %cst_47 : f32 to vector<8x16x16xf32>
    %45 = arith.mulf %8, %44 : vector<8x16x16xf32>
    %46 = arith.addf %43, %45 : vector<8x16x16xf32>
    %cst_48 = arith.constant 6.250000e-02 : f32
    %47 = vector.broadcast %cst_48 : f32 to vector<8x16x16xf32>
    %48 = arith.mulf %11, %47 : vector<8x16x16xf32>
    %49 = arith.addf %46, %48 : vector<8x16x16xf32>
    %cst_49 = arith.constant 1.875000e-01 : f32
    %50 = vector.broadcast %cst_49 : f32 to vector<8x16x16xf32>
    %51 = arith.mulf %12, %50 : vector<8x16x16xf32>
    %52 = arith.addf %49, %51 : vector<8x16x16xf32>
    %c0_50 = arith.constant 0 : index
    %c2_51 = arith.constant 2 : index
    %c0_52 = arith.constant 0 : index
    %c0_53 = arith.constant 0 : index
    %53 = vector.load %arg2[%c0_50, %c2_51, %c0_52, %c0_53] : memref<8x4x16x16xf32, #tpu.memory_space<vmem>>, vector<8x1x16x16xf32>
    %54 = vector.shape_cast %53 : vector<8x1x16x16xf32> to vector<8x16x16xf32>
    %55 = vector.shape_cast %52 : vector<8x16x16xf32> to vector<8x1x16x16xf32>
    tpu.vector_store %arg2[%c0_50, %c2_51, %c0_52, %c0_53], %55 {strides = array<i32>} : memref<8x4x16x16xf32, #tpu.memory_space<vmem>>, vector<8x1x16x16xf32>,
    %cst_54 = arith.constant 5.625000e-01 : f32
    %56 = vector.broadcast %cst_54 : f32 to vector<8x16x16xf32>
    %57 = arith.mulf %8, %56 : vector<8x16x16xf32>
    %cst_55 = arith.constant 1.875000e-01 : f32
    %58 = vector.broadcast %cst_55 : f32 to vector<8x16x16xf32>
    %59 = arith.mulf %10, %58 : vector<8x16x16xf32>
    %60 = arith.addf %57, %59 : vector<8x16x16xf32>
    %cst_56 = arith.constant 1.875000e-01 : f32
    %61 = vector.broadcast %cst_56 : f32 to vector<8x16x16xf32>
    %62 = arith.mulf %12, %61 : vector<8x16x16xf32>
    %63 = arith.addf %60, %62 : vector<8x16x16xf32>
    %cst_57 = arith.constant 6.250000e-02 : f32
    %64 = vector.broadcast %cst_57 : f32 to vector<8x16x16xf32>
    %65 = arith.mulf %13, %64 : vector<8x16x16xf32>
    %66 = arith.addf %63, %65 : vector<8x16x16xf32>
    %c0_58 = arith.constant 0 : index
    %c3 = arith.constant 3 : index
    %c0_59 = arith.constant 0 : index
    %c0_60 = arith.constant 0 : index
    %67 = vector.load %arg2[%c0_58, %c3, %c0_59, %c0_60] : memref<8x4x16x16xf32, #tpu.memory_space<vmem>>, vector<8x1x16x16xf32>
    %68 = vector.shape_cast %67 : vector<8x1x16x16xf32> to vector<8x16x16xf32>
    %69 = vector.shape_cast %66 : vector<8x16x16xf32> to vector<8x1x16x16xf32>
    tpu.vector_store %arg2[%c0_58, %c3, %c0_59, %c0_60], %69 {strides = array<i32>} : memref<8x4x16x16xf32, #tpu.memory_space<vmem>>, vector<8x1x16x16xf32>,
    return
  }
  func.func @transform_0(%arg0: i32) -> (i32, i32, i32) {
    %c0_i32 = arith.constant 0 : i32
    %c0_i32_0 = arith.constant 0 : i32
    %c0_i32_1 = arith.constant 0 : i32
    return %arg0, %c0_i32, %c0_i32_0 : i32, i32, i32
  }
  func.func @transform_1(%arg0: i32) -> (i32, i32, i32, i32) {
    %c0_i32 = arith.constant 0 : i32
    %c0_i32_0 = arith.constant 0 : i32
    %c0_i32_1 = arith.constant 0 : i32
    %c0_i32_2 = arith.constant 0 : i32
    return %arg0, %c0_i32, %c0_i32_0, %c0_i32_1 : i32, i32, i32, i32
  }
}

</mosaic_0001>

<llo_original>
// kernel: tpu_custom_call.1
$region0: #{tpu_custom_call.1}
  #allocation0 [shape = 'u32[]', space=smem, size = 0x4, offset = 0x4, fixed_abs, tag = 'smem constant byte address 0x4 - core index']
  #allocation1 [shape = 'u32[144,128]{1,0:T(1,128)}', space=vmem, size = 0x12000, scoped, tag = 'internal scratch']
  #allocation2 [shape = 'f32[8,18,18]{2,1,0:T(8,128)}', space=vmem, size = 0x18000, scoped, tag = 'scratch operand']
  %s0 = inlined_call_operand.hbm [shape: f32[8,16,16], index: 0, kind: input, shape index: {}]
  %s1 = inlined_call_operand.hbm [shape: f32[8,4,16,16], index: 1, kind: output, shape index: {}]
  %s2 = sld [smem:[#allocation0]]
  $region22: #{tpu_custom_call.1} parent=0
    _
  %s4 = ssub.s32 1, %s2
  %s5 = scalar_select 0, %s4, %s2
  $region1: #{tpu_custom_call.1} parent=0
    #allocation3 [shape = 'u8[65536]{0}', space=vmem, size = 0x10000, scoped, tag = 'input window, operand 0, single buffered']
    #allocation4 [shape = 's32[1]{0}', space=sflag, size = 0x4, scoped, tag = 'scoped memory for tpu_custom_call.1']
    #allocation5 [shape = 's32[1]{0}', space=sflag, size = 0x4, scoped, tag = 'scoped memory for tpu_custom_call.1']
    #allocation6 [shape = 'u8[262144]{0}', space=vmem, size = 0x40000, scoped, tag = 'output window, operand 0, single buffered']
    %6 = vsyncpa [#allocation4], 0
    %7 = vsyncpa [#allocation5], 0
    // Predicated region
    $region2: #{tpu_custom_call.1} parent=1 // pred_check
      _
    $region3: #{tpu_custom_call.1} parent=1 // pred_check_branch
      %9 = sbr.rel (0) target = $region5
    $region4: #{tpu_custom_call.1} parent=1 // pred_region
      %s11 = ssub.s32 2048, 2048
      %12 = vsyncadd [#allocation4], %s11
      %s13 = sshll.u32 [#allocation3], 4
      %s14 = int_to_ptr.vmem [resolvable:$true] %s13
      %19 = dma.hbm_to_vmem [thread:$0]  %s0, 2048, %s14, [#allocation4], 128, 128, 8
    $region5: #{tpu_custom_call.1} parent=1 // pred_fallthru
      _
    // Predicated region
    $region6: #{tpu_custom_call.1} parent=1 // pred_check
      _
    $region7: #{tpu_custom_call.1} parent=1 // pred_check_branch
      %21 = sbr.rel (0) target = $region9
    $region8: #{tpu_custom_call.1} parent=1 // pred_region
      %22 = dma.done [#allocation4], 2048
    $region9: #{tpu_custom_call.1} parent=1 // pred_fallthru
      _
    %p23 = scmp.eq.s32.totalorder 0, 0
    // Predicated region
    $region10: #{tpu_custom_call.1} parent=1 // pred_check
      %p24 = pneg %p23
    $region11: #{tpu_custom_call.1} parent=1 // pred_check_branch
      %26 = sbr.rel (%p24) target = $region13
    $region12: #{tpu_custom_call.1} parent=1 // pred_region
      %vm27 = vcmask 146432
      %28 = vst.msk [vmem:[#allocation2] sm:$0xff] %vm27, 0.0
      %29 = vst.msk [vmem:[#allocation2 + $0x8] sm:$0xff] %vm27, 0.0
      %vm30 = vcmask 140288
      %31 = vst.msk [vmem:[#allocation2 + $0x10] sm:$0x3] %vm30, 0.0
      %32 = vst.msk [vmem:[#allocation2 + $0x18] sm:$0xff] %vm27, 0.0
      %33 = vst.msk [vmem:[#allocation2 + $0x20] sm:$0xff] %vm27, 0.0
      %34 = vst.msk [vmem:[#allocation2 + $0x28] sm:$0x3] %vm30, 0.0
      %35 = vst.msk [vmem:[#allocation2 + $0x30] sm:$0xff] %vm27, 0.0
      %36 = vst.msk [vmem:[#allocation2 + $0x38] sm:$0xff] %vm27, 0.0
      %37 = vst.msk [vmem:[#allocation2 + $0x40] sm:$0x3] %vm30, 0.0
      %38 = vst.msk [vmem:[#allocation2 + $0x48] sm:$0xff] %vm27, 0.0
      %39 = vst.msk [vmem:[#allocation2 + $0x50] sm:$0xff] %vm27, 0.0
      %40 = vst.msk [vmem:[#allocation2 + $0x58] sm:$0x3] %vm30, 0.0
      %41 = vst.msk [vmem:[#allocation2 + $0x60] sm:$0xff] %vm27, 0.0
      %42 = vst.msk [vmem:[#allocation2 + $0x68] sm:$0xff] %vm27, 0.0
      %43 = vst.msk [vmem:[#allocation2 + $0x70] sm:$0x3] %vm30, 0.0
      %44 = vst.msk [vmem:[#allocation2 + $0x78] sm:$0xff] %vm27, 0.0
      %45 = vst.msk [vmem:[#allocation2 + $0x80] sm:$0xff] %vm27, 0.0
      %46 = vst.msk [vmem:[#allocation2 + $0x88] sm:$0x3] %vm30, 0.0
      %47 = vst.msk [vmem:[#allocation2 + $0x90] sm:$0xff] %vm27, 0.0
      %48 = vst.msk [vmem:[#allocation2 + $0x98] sm:$0xff] %vm27, 0.0
      %49 = vst.msk [vmem:[#allocation2 + $0xa0] sm:$0x3] %vm30, 0.0
      %50 = vst.msk [vmem:[#allocation2 + $0xa8] sm:$0xff] %vm27, 0.0
      %51 = vst.msk [vmem:[#allocation2 + $0xb0] sm:$0xff] %vm27, 0.0
      %52 = vst.msk [vmem:[#allocation2 + $0xb8] sm:$0x3] %vm30, 0.0
    $region13: #{tpu_custom_call.1} parent=1 // pred_fallthru
      _
    %v53 = vld [vmem:[#allocation3] sm:$0xff]
    %v54 = vld [vmem:[#allocation3 + $0x8] sm:$0xff]
    %v55 = vld [vmem:[#allocation3 + $0x10] sm:$0xff]
    %v56 = vld [vmem:[#allocation3 + $0x18] sm:$0xff]
    %v57 = vld [vmem:[#allocation3 + $0x20] sm:$0xff]
    %v58 = vld [vmem:[#allocation3 + $0x28] sm:$0xff]
    %v59 = vld [vmem:[#allocation3 + $0x30] sm:$0xff]
    %v60 = vld [vmem:[#allocation3 + $0x38] sm:$0xff]
    %v61 = vld [vmem:[#allocation3 + $0x40] sm:$0xff]
    %v62 = vld [vmem:[#allocation3 + $0x48] sm:$0xff]
    %v63 = vld [vmem:[#allocation3 + $0x50] sm:$0xff]
    %v64 = vld [vmem:[#allocation3 + $0x58] sm:$0xff]
    %v65 = vld [vmem:[#allocation3 + $0x60] sm:$0xff]
    %v66 = vld [vmem:[#allocation3 + $0x68] sm:$0xff]
    %v67 = vld [vmem:[#allocation3 + $0x70] sm:$0xff]
    %v68 = vld [vmem:[#allocation3 + $0x78] sm:$0xff]
    %85 = vrot.lane.b32.xlu0 %v53, 1
    %v86 = vpop.permute.xlu0 %85
    %87 = vrot.lane.b32.xlu0 %v54, 1
    %v88 = vpop.permute.xlu0 %87
    %89 = vrot.lane.b32.xlu0 %v55, 1
    %v90 = vpop.permute.xlu0 %89
    %91 = vrot.lane.b32.xlu0 %v56, 1
    %v92 = vpop.permute.xlu0 %91
    %93 = vrot.lane.b32.xlu0 %v57, 1
    %v94 = vpop.permute.xlu0 %93
    %95 = vrot.lane.b32.xlu0 %v58, 1
    %v96 = vpop.permute.xlu0 %95
    %97 = vrot.lane.b32.xlu0 %v59, 1
    %v98 = vpop.permute.xlu0 %97
    %99 = vrot.lane.b32.xlu0 %v60, 1
    %v100 = vpop.permute.xlu0 %99
    %101 = vrot.lane.b32.xlu0 %v61, 1
    %v102 = vpop.permute.xlu0 %101
    %103 = vrot.lane.b32.xlu0 %v62, 1
    %v104 = vpop.permute.xlu0 %103
    %105 = vrot.lane.b32.xlu0 %v63, 1
    %v106 = vpop.permute.xlu0 %105
    %107 = vrot.lane.b32.xlu0 %v64, 1
    %v108 = vpop.permute.xlu0 %107
    %109 = vrot.lane.b32.xlu0 %v65, 1
    %v110 = vpop.permute.xlu0 %109
    %111 = vrot.lane.b32.xlu0 %v66, 1
    %v112 = vpop.permute.xlu0 %111
    %113 = vrot.lane.b32.xlu0 %v67, 1
    %v114 = vpop.permute.xlu0 %113
    %115 = vrot.lane.b32.xlu0 %v68, 1
    %v116 = vpop.permute.xlu0 %115
    %vm133 = vcmask 138248
    %134 = vst.msk [vmem:[#allocation2 + $0x1] sm:$0xff] %vm133, %v86
    %135 = vst.msk [vmem:[#allocation2 + $0x9] sm:$0xff] %vm133, %v88
    %136 = vst.msk [vmem:[#allocation2 + $0x19] sm:$0xff] %vm133, %v90
    %137 = vst.msk [vmem:[#allocation2 + $0x21] sm:$0xff] %vm133, %v92
    %138 = vst.msk [vmem:[#allocation2 + $0x31] sm:$0xff] %vm133, %v94
    %139 = vst.msk [vmem:[#allocation2 + $0x39] sm:$0xff] %vm133, %v96
    %140 = vst.msk [vmem:[#allocation2 + $0x49] sm:$0xff] %vm133, %v98
    %141 = vst.msk [vmem:[#allocation2 + $0x51] sm:$0xff] %vm133, %v100
    %142 = vst.msk [vmem:[#allocation2 + $0x61] sm:$0xff] %vm133, %v102
    %143 = vst.msk [vmem:[#allocation2 + $0x69] sm:$0xff] %vm133, %v104
    %144 = vst.msk [vmem:[#allocation2 + $0x79] sm:$0xff] %vm133, %v106
    %145 = vst.msk [vmem:[#allocation2 + $0x81] sm:$0xff] %vm133, %v108
    %146 = vst.msk [vmem:[#allocation2 + $0x91] sm:$0xff] %vm133, %v110
    %147 = vst.msk [vmem:[#allocation2 + $0x99] sm:$0xff] %vm133, %v112
    %148 = vst.msk [vmem:[#allocation2 + $0xa9] sm:$0xff] %vm133, %v114
    %149 = vst.msk [vmem:[#allocation2 + $0xb1] sm:$0xff] %vm133, %v116
    %v150 = vld [vmem:[#allocation2] sm:$0xff]
    %v151 = vld [vmem:[#allocation2 + $0x8] sm:$0xff]
    %v152 = vld [vmem:[#allocation2 + $0x18] sm:$0xff]
    %v153 = vld [vmem:[#allocation2 + $0x20] sm:$0xff]
    %v154 = vld [vmem:[#allocation2 + $0x30] sm:$0xff]
    %v155 = vld [vmem:[#allocation2 + $0x38] sm:$0xff]
    %v156 = vld [vmem:[#allocation2 + $0x48] sm:$0xff]
    %v157 = vld [vmem:[#allocation2 + $0x50] sm:$0xff]
    %v158 = vld [vmem:[#allocation2 + $0x60] sm:$0xff]
    %v159 = vld [vmem:[#allocation2 + $0x68] sm:$0xff]
    %v160 = vld [vmem:[#allocation2 + $0x78] sm:$0xff]
    %v161 = vld [vmem:[#allocation2 + $0x80] sm:$0xff]
    %v162 = vld [vmem:[#allocation2 + $0x90] sm:$0xff]
    %v163 = vld [vmem:[#allocation2 + $0x98] sm:$0xff]
    %v164 = vld [vmem:[#allocation2 + $0xa8] sm:$0xff]
    %v165 = vld [vmem:[#allocation2 + $0xb0] sm:$0xff]
    %v166 = vld [vmem:[#allocation2 + $0x1] sm:$0xff]
    %v167 = vld [vmem:[#allocation2 + $0x9] sm:$0xff]
    %v168 = vld [vmem:[#allocation2 + $0x19] sm:$0xff]
    %v169 = vld [vmem:[#allocation2 + $0x21] sm:$0xff]
    %v170 = vld [vmem:[#allocation2 + $0x31] sm:$0xff]
    %v171 = vld [vmem:[#allocation2 + $0x39] sm:$0xff]
    %v172 = vld [vmem:[#allocation2 + $0x49] sm:$0xff]
    %v173 = vld [vmem:[#allocation2 + $0x51] sm:$0xff]
    %v174 = vld [vmem:[#allocation2 + $0x61] sm:$0xff]
    %v175 = vld [vmem:[#allocation2 + $0x69] sm:$0xff]
    %v176 = vld [vmem:[#allocation2 + $0x79] sm:$0xff]
    %v177 = vld [vmem:[#allocation2 + $0x81] sm:$0xff]
    %v178 = vld [vmem:[#allocation2 + $0x91] sm:$0xff]
    %v179 = vld [vmem:[#allocation2 + $0x99] sm:$0xff]
    %v180 = vld [vmem:[#allocation2 + $0xa9] sm:$0xff]
    %v181 = vld [vmem:[#allocation2 + $0xb1] sm:$0xff]
    %v182 = vld [vmem:[#allocation2 + $0x2] sm:$0xff]
    %v183 = vld [vmem:[#allocation2 + $0xa] sm:$0xff]
    %v184 = vld [vmem:[#allocation2 + $0x1a] sm:$0xff]
    %v185 = vld [vmem:[#allocation2 + $0x22] sm:$0xff]
    %v186 = vld [vmem:[#allocation2 + $0x32] sm:$0xff]
    %v187 = vld [vmem:[#allocation2 + $0x3a] sm:$0xff]
    %v188 = vld [vmem:[#allocation2 + $0x4a] sm:$0xff]
    %v189 = vld [vmem:[#allocation2 + $0x52] sm:$0xff]
    %v190 = vld [vmem:[#allocation2 + $0x62] sm:$0xff]
    %v191 = vld [vmem:[#allocation2 + $0x6a] sm:$0xff]
    %v192 = vld [vmem:[#allocation2 + $0x7a] sm:$0xff]
    %v193 = vld [vmem:[#allocation2 + $0x82] sm:$0xff]
    %v194 = vld [vmem:[#allocation2 + $0x92] sm:$0xff]
    %v195 = vld [vmem:[#allocation2 + $0x9a] sm:$0xff]
    %v196 = vld [vmem:[#allocation2 + $0xaa] sm:$0xff]
    %v197 = vld [vmem:[#allocation2 + $0xb2] sm:$0xff]
    %v198 = vmul.f32 %v150, 0.0625
    %v199 = vmul.f32 %v151, 0.0625
    %v200 = vmul.f32 %v152, 0.0625
    %v201 = vmul.f32 %v153, 0.0625
    %v202 = vmul.f32 %v154, 0.0625
    %v203 = vmul.f32 %v155, 0.0625
    %v204 = vmul.f32 %v156, 0.0625
    %v205 = vmul.f32 %v157, 0.0625
    %v206 = vmul.f32 %v158, 0.0625
    %v207 = vmul.f32 %v159, 0.0625
    %v208 = vmul.f32 %v160, 0.0625
    %v209 = vmul.f32 %v161, 0.0625
    %v210 = vmul.f32 %v162, 0.0625
    %v211 = vmul.f32 %v163, 0.0625
    %v212 = vmul.f32 %v164, 0.0625
    %v213 = vmul.f32 %v165, 0.0625
    %v214 = vmul.f32 %v150, 0.1875
    %v215 = vmul.f32 %v151, 0.1875
    %v216 = vmul.f32 %v152, 0.1875
    %v217 = vmul.f32 %v153, 0.1875
    %v218 = vmul.f32 %v154, 0.1875
    %v219 = vmul.f32 %v155, 0.1875
    %v220 = vmul.f32 %v156, 0.1875
    %v221 = vmul.f32 %v157, 0.1875
    %v222 = vmul.f32 %v158, 0.1875
    %v223 = vmul.f32 %v159, 0.1875
    %v224 = vmul.f32 %v160, 0.1875
    %v225 = vmul.f32 %v161, 0.1875
    %v226 = vmul.f32 %v162, 0.1875
    %v227 = vmul.f32 %v163, 0.1875
    %v228 = vmul.f32 %v164, 0.1875
    %v229 = vmul.f32 %v165, 0.1875
    %246 = vrot.lane.b32.xlu0 %v214, 127
    %v247 = vpop.permute.xlu0 %246
    %248 = vrot.lane.b32.xlu0 %v215, 127
    %v249 = vpop.permute.xlu0 %248
    %250 = vrot.lane.b32.xlu0 %v216, 127
    %v251 = vpop.permute.xlu0 %250
    %252 = vrot.lane.b32.xlu0 %v217, 127
    %v253 = vpop.permute.xlu0 %252
    %254 = vrot.lane.b32.xlu0 %v218, 127
    %v255 = vpop.permute.xlu0 %254
    %256 = vrot.lane.b32.xlu0 %v219, 127
    %v257 = vpop.permute.xlu0 %256
    %258 = vrot.lane.b32.xlu0 %v220, 127
    %v259 = vpop.permute.xlu0 %258
    %260 = vrot.lane.b32.xlu0 %v221, 127
    %v261 = vpop.permute.xlu0 %260
    %262 = vrot.lane.b32.xlu0 %v222, 127
    %v263 = vpop.permute.xlu0 %262
    %264 = vrot.lane.b32.xlu0 %v223, 127
    %v265 = vpop.permute.xlu0 %264
    %266 = vrot.lane.b32.xlu0 %v224, 127
    %v267 = vpop.permute.xlu0 %266
    %268 = vrot.lane.b32.xlu0 %v225, 127
    %v269 = vpop.permute.xlu0 %268
    %270 = vrot.lane.b32.xlu0 %v226, 127
    %v271 = vpop.permute.xlu0 %270
    %272 = vrot.lane.b32.xlu0 %v227, 127
    %v273 = vpop.permute.xlu0 %272
    %274 = vrot.lane.b32.xlu0 %v228, 127
    %v275 = vpop.permute.xlu0 %274
    %276 = vrot.lane.b32.xlu0 %v229, 127
    %v277 = vpop.permute.xlu0 %276
    %v294 = vadd.f32 %v198, %v247
    %v295 = vadd.f32 %v199, %v249
    %v296 = vadd.f32 %v200, %v251
    %v297 = vadd.f32 %v201, %v253
    %v298 = vadd.f32 %v202, %v255
    %v299 = vadd.f32 %v203, %v257
    %v300 = vadd.f32 %v204, %v259
    %v301 = vadd.f32 %v205, %v261
    %v302 = vadd.f32 %v206, %v263
    %v303 = vadd.f32 %v207, %v265
    %v304 = vadd.f32 %v208, %v267
    %v305 = vadd.f32 %v209, %v269
    %v306 = vadd.f32 %v210, %v271
    %v307 = vadd.f32 %v211, %v273
    %v308 = vadd.f32 %v212, %v275
    %v309 = vadd.f32 %v213, %v277
    %v310 = vmul.f32 %v166, 0.1875
    %v311 = vmul.f32 %v167, 0.1875
    %v312 = vmul.f32 %v168, 0.1875
    %v313 = vmul.f32 %v169, 0.1875
    %v314 = vmul.f32 %v170, 0.1875
    %v315 = vmul.f32 %v171, 0.1875
    %v316 = vmul.f32 %v172, 0.1875
    %v317 = vmul.f32 %v173, 0.1875
    %v318 = vmul.f32 %v174, 0.1875
    %v319 = vmul.f32 %v175, 0.1875
    %v320 = vmul.f32 %v176, 0.1875
    %v321 = vmul.f32 %v177, 0.1875
    %v322 = vmul.f32 %v178, 0.1875
    %v323 = vmul.f32 %v179, 0.1875
    %v324 = vmul.f32 %v180, 0.1875
    %v325 = vmul.f32 %v181, 0.1875
    %v326 = vadd.f32 %v294, %v310
    %v327 = vadd.f32 %v295, %v311
    %v328 = vadd.f32 %v296, %v312
    %v329 = vadd.f32 %v297, %v313
    %v330 = vadd.f32 %v298, %v314
    %v331 = vadd.f32 %v299, %v315
    %v332 = vadd.f32 %v300, %v316
    %v333 = vadd.f32 %v301, %v317
    %v334 = vadd.f32 %v302, %v318
    %v335 = vadd.f32 %v303, %v319
    %v336 = vadd.f32 %v304, %v320
    %v337 = vadd.f32 %v305, %v321
    %v338 = vadd.f32 %v306, %v322
    %v339 = vadd.f32 %v307, %v323
    %v340 = vadd.f32 %v308, %v324
    %v341 = vadd.f32 %v309, %v325
    %v342 = vmul.f32 %v166, 0.5625
    %v343 = vmul.f32 %v167, 0.5625
    %v344 = vmul.f32 %v168, 0.5625
    %v345 = vmul.f32 %v169, 0.5625
    %v346 = vmul.f32 %v170, 0.5625
    %v347 = vmul.f32 %v171, 0.5625
    %v348 = vmul.f32 %v172, 0.5625
    %v349 = vmul.f32 %v173, 0.5625
    %v350 = vmul.f32 %v174, 0.5625
    %v351 = vmul.f32 %v175, 0.5625
    %v352 = vmul.f32 %v176, 0.5625
    %v353 = vmul.f32 %v177, 0.5625
    %v354 = vmul.f32 %v178, 0.5625
    %v355 = vmul.f32 %v179, 0.5625
    %v356 = vmul.f32 %v180, 0.5625
    %v357 = vmul.f32 %v181, 0.5625
    %374 = vrot.lane.b32.xlu0 %v342, 127
    %v375 = vpop.permute.xlu0 %374
    %376 = vrot.lane.b32.xlu0 %v343, 127
    %v377 = vpop.permute.xlu0 %376
    %378 = vrot.lane.b32.xlu0 %v344, 127
    %v379 = vpop.permute.xlu0 %378
    %380 = vrot.lane.b32.xlu0 %v345, 127
    %v381 = vpop.permute.xlu0 %380
    %382 = vrot.lane.b32.xlu0 %v346, 127
    %v383 = vpop.permute.xlu0 %382
    %384 = vrot.lane.b32.xlu0 %v347, 127
    %v385 = vpop.permute.xlu0 %384
    %386 = vrot.lane.b32.xlu0 %v348, 127
    %v387 = vpop.permute.xlu0 %386
    %388 = vrot.lane.b32.xlu0 %v349, 127
    %v389 = vpop.permute.xlu0 %388
    %390 = vrot.lane.b32.xlu0 %v350, 127
    %v391 = vpop.permute.xlu0 %390
    %392 = vrot.lane.b32.xlu0 %v351, 127
    %v393 = vpop.permute.xlu0 %392
    %394 = vrot.lane.b32.xlu0 %v352, 127
    %v395 = vpop.permute.xlu0 %394
    %396 = vrot.lane.b32.xlu0 %v353, 127
    %v397 = vpop.permute.xlu0 %396
    %398 = vrot.lane.b32.xlu0 %v354, 127
    %v399 = vpop.permute.xlu0 %398
    %400 = vrot.lane.b32.xlu0 %v355, 127
    %v401 = vpop.permute.xlu0 %400
    %402 = vrot.lane.b32.xlu0 %v356, 127
    %v403 = vpop.permute.xlu0 %402
    %404 = vrot.lane.b32.xlu0 %v357, 127
    %v405 = vpop.permute.xlu0 %404
    %v422 = vadd.f32 %v326, %v375
    %v423 = vadd.f32 %v327, %v377
    %v424 = vadd.f32 %v328, %v379
    %v425 = vadd.f32 %v329, %v381
    %v426 = vadd.f32 %v330, %v383
    %v427 = vadd.f32 %v331, %v385
    %v428 = vadd.f32 %v332, %v387
    %v429 = vadd.f32 %v333, %v389
    %v430 = vadd.f32 %v334, %v391
    %v431 = vadd.f32 %v335, %v393
    %v432 = vadd.f32 %v336, %v395
    %v433 = vadd.f32 %v337, %v397
    %v434 = vadd.f32 %v338, %v399
    %v435 = vadd.f32 %v339, %v401
    %v436 = vadd.f32 %v340, %v403
    %v437 = vadd.f32 %v341, %v405
    %vm438 = vcmask 130048
    %439 = vst.msk [vmem:[#allocation6] sm:$0xff] %vm438, %v422
    %440 = vst.msk [vmem:[#allocation6 + $0x8] sm:$0xff] %vm438, %v423
    %441 = vst.msk [vmem:[#allocation6 + $0x40] sm:$0xff] %vm438, %v424
    %442 = vst.msk [vmem:[#allocation6 + $0x48] sm:$0xff] %vm438, %v425
    %443 = vst.msk [vmem:[#allocation6 + $0x80] sm:$0xff] %vm438, %v426
    %444 = vst.msk [vmem:[#allocation6 + $0x88] sm:$0xff] %vm438, %v427
    %445 = vst.msk [vmem:[#allocation6 + $0xc0] sm:$0xff] %vm438, %v428
    %446 = vst.msk [vmem:[#allocation6 + $0xc8] sm:$0xff] %vm438, %v429
    %447 = vst.msk [vmem:[#allocation6 + $0x100] sm:$0xff] %vm438, %v430
    %448 = vst.msk [vmem:[#allocation6 + $0x108] sm:$0xff] %vm438, %v431
    %449 = vst.msk [vmem:[#allocation6 + $0x140] sm:$0xff] %vm438, %v432
    %450 = vst.msk [vmem:[#allocation6 + $0x148] sm:$0xff] %vm438, %v433
    %451 = vst.msk [vmem:[#allocation6 + $0x180] sm:$0xff] %vm438, %v434
    %452 = vst.msk [vmem:[#allocation6 + $0x188] sm:$0xff] %vm438, %v435
    %453 = vst.msk [vmem:[#allocation6 + $0x1c0] sm:$0xff] %vm438, %v436
    %454 = vst.msk [vmem:[#allocation6 + $0x1c8] sm:$0xff] %vm438, %v437
    %471 = vrot.lane.b32.xlu0 %v198, 127
    %v472 = vpop.permute.xlu0 %471
    %473 = vrot.lane.b32.xlu0 %v199, 127
    %v474 = vpop.permute.xlu0 %473
    %475 = vrot.lane.b32.xlu0 %v200, 127
    %v476 = vpop.permute.xlu0 %475
    %477 = vrot.lane.b32.xlu0 %v201, 127
    %v478 = vpop.permute.xlu0 %477
    %479 = vrot.lane.b32.xlu0 %v202, 127
    %v480 = vpop.permute.xlu0 %479
    %481 = vrot.lane.b32.xlu0 %v203, 127
    %v482 = vpop.permute.xlu0 %481
    %483 = vrot.lane.b32.xlu0 %v204, 127
    %v484 = vpop.permute.xlu0 %483
    %485 = vrot.lane.b32.xlu0 %v205, 127
    %v486 = vpop.permute.xlu0 %485
    %487 = vrot.lane.b32.xlu0 %v206, 127
    %v488 = vpop.permute.xlu0 %487
    %489 = vrot.lane.b32.xlu0 %v207, 127
    %v490 = vpop.permute.xlu0 %489
    %491 = vrot.lane.b32.xlu0 %v208, 127
    %v492 = vpop.permute.xlu0 %491
    %493 = vrot.lane.b32.xlu0 %v209, 127
    %v494 = vpop.permute.xlu0 %493
    %495 = vrot.lane.b32.xlu0 %v210, 127
    %v496 = vpop.permute.xlu0 %495
    %497 = vrot.lane.b32.xlu0 %v211, 127
    %v498 = vpop.permute.xlu0 %497
    %499 = vrot.lane.b32.xlu0 %v212, 127
    %v500 = vpop.permute.xlu0 %499
    %501 = vrot.lane.b32.xlu0 %v213, 127
    %v502 = vpop.permute.xlu0 %501
    %v519 = vadd.f32 %v214, %v472
    %v520 = vadd.f32 %v215, %v474
    %v521 = vadd.f32 %v216, %v476
    %v522 = vadd.f32 %v217, %v478
    %v523 = vadd.f32 %v218, %v480
    %v524 = vadd.f32 %v219, %v482
    %v525 = vadd.f32 %v220, %v484
    %v526 = vadd.f32 %v221, %v486
    %v527 = vadd.f32 %v222, %v488
    %v528 = vadd.f32 %v223, %v490
    %v529 = vadd.f32 %v224, %v492
    %v530 = vadd.f32 %v225, %v494
    %v531 = vadd.f32 %v226, %v496
    %v532 = vadd.f32 %v227, %v498
    %v533 = vadd.f32 %v228, %v500
    %v534 = vadd.f32 %v229, %v502
    %v535 = vadd.f32 %v519, %v342
    %v536 = vadd.f32 %v520, %v343
    %v537 = vadd.f32 %v521, %v344
    %v538 = vadd.f32 %v522, %v345
    %v539 = vadd.f32 %v523, %v346
    %v540 = vadd.f32 %v524, %v347
    %v541 = vadd.f32 %v525, %v348
    %v542 = vadd.f32 %v526, %v349
    %v543 = vadd.f32 %v527, %v350
    %v544 = vadd.f32 %v528, %v351
    %v545 = vadd.f32 %v529, %v352
    %v546 = vadd.f32 %v530, %v353
    %v547 = vadd.f32 %v531, %v354
    %v548 = vadd.f32 %v532, %v355
    %v549 = vadd.f32 %v533, %v356
    %v550 = vadd.f32 %v534, %v357
    %567 = vrot.lane.b32.xlu0 %v310, 127
    %v568 = vpop.permute.xlu0 %567
    %569 = vrot.lane.b32.xlu0 %v311, 127
    %v570 = vpop.permute.xlu0 %569
    %571 = vrot.lane.b32.xlu0 %v312, 127
    %v572 = vpop.permute.xlu0 %571
    %573 = vrot.lane.b32.xlu0 %v313, 127
    %v574 = vpop.permute.xlu0 %573
    %575 = vrot.lane.b32.xlu0 %v314, 127
    %v576 = vpop.permute.xlu0 %575
    %577 = vrot.lane.b32.xlu0 %v315, 127
    %v578 = vpop.permute.xlu0 %577
    %579 = vrot.lane.b32.xlu0 %v316, 127
    %v580 = vpop.permute.xlu0 %579
    %581 = vrot.lane.b32.xlu0 %v317, 127
    %v582 = vpop.permute.xlu0 %581
    %583 = vrot.lane.b32.xlu0 %v318, 127
    %v584 = vpop.permute.xlu0 %583
    %585 = vrot.lane.b32.xlu0 %v319, 127
    %v586 = vpop.permute.xlu0 %585
    %587 = vrot.lane.b32.xlu0 %v320, 127
    %v588 = vpop.permute.xlu0 %587
    %589 = vrot.lane.b32.xlu0 %v321, 127
    %v590 = vpop.permute.xlu0 %589
    %591 = vrot.lane.b32.xlu0 %v322, 127
    %v592 = vpop.permute.xlu0 %591
    %593 = vrot.lane.b32.xlu0 %v323, 127
    %v594 = vpop.permute.xlu0 %593
    %595 = vrot.lane.b32.xlu0 %v324, 127
    %v596 = vpop.permute.xlu0 %595
    %597 = vrot.lane.b32.xlu0 %v325, 127
    %v598 = vpop.permute.xlu0 %597
    %v615 = vadd.f32 %v535, %v568
    %v616 = vadd.f32 %v536, %v570
    %v617 = vadd.f32 %v537, %v572
    %v618 = vadd.f32 %v538, %v574
    %v619 = vadd.f32 %v539, %v576
    %v620 = vadd.f32 %v540, %v578
    %v621 = vadd.f32 %v541, %v580
    %v622 = vadd.f32 %v542, %v582
    %v623 = vadd.f32 %v543, %v584
    %v624 = vadd.f32 %v544, %v586
    %v625 = vadd.f32 %v545, %v588
    %v626 = vadd.f32 %v546, %v590
    %v627 = vadd.f32 %v547, %v592
    %v628 = vadd.f32 %v548, %v594
    %v629 = vadd.f32 %v549, %v596
    %v630 = vadd.f32 %v550, %v598
    %647 = vrot.lane.b32.xlu0 %v615, 127
    %v648 = vpop.permute.xlu0 %647
    %649 = vrot.lane.b32.xlu0 %v616, 127
    %v650 = vpop.permute.xlu0 %649
    %651 = vrot.lane.b32.xlu0 %v617, 127
    %v652 = vpop.permute.xlu0 %651
    %653 = vrot.lane.b32.xlu0 %v618, 127
    %v654 = vpop.permute.xlu0 %653
    %655 = vrot.lane.b32.xlu0 %v619, 127
    %v656 = vpop.permute.xlu0 %655
    %657 = vrot.lane.b32.xlu0 %v620, 127
    %v658 = vpop.permute.xlu0 %657
    %659 = vrot.lane.b32.xlu0 %v621, 127
    %v660 = vpop.permute.xlu0 %659
    %661 = vrot.lane.b32.xlu0 %v622, 127
    %v662 = vpop.permute.xlu0 %661
    %663 = vrot.lane.b32.xlu0 %v623, 127
    %v664 = vpop.permute.xlu0 %663
    %665 = vrot.lane.b32.xlu0 %v624, 127
    %v666 = vpop.permute.xlu0 %665
    %667 = vrot.lane.b32.xlu0 %v625, 127
    %v668 = vpop.permute.xlu0 %667
    %669 = vrot.lane.b32.xlu0 %v626, 127
    %v670 = vpop.permute.xlu0 %669
    %671 = vrot.lane.b32.xlu0 %v627, 127
    %v672 = vpop.permute.xlu0 %671
    %673 = vrot.lane.b32.xlu0 %v628, 127
    %v674 = vpop.permute.xlu0 %673
    %675 = vrot.lane.b32.xlu0 %v629, 127
    %v676 = vpop.permute.xlu0 %675
    %677 = vrot.lane.b32.xlu0 %v630, 127
    %v678 = vpop.permute.xlu0 %677
    %s695 = scalar_lea.vmem [#allocation6], 16
    %696 = vst.msk [vmem:[%s695] sm:$0xff] %vm438, %v648
    %697 = vst.msk [vmem:[%s695 + $0x8] sm:$0xff] %vm438, %v650
    %698 = vst.msk [vmem:[%s695 + $0x40] sm:$0xff] %vm438, %v652
    %699 = vst.msk [vmem:[%s695 + $0x48] sm:$0xff] %vm438, %v654
    %700 = vst.msk [vmem:[%s695 + $0x80] sm:$0xff] %vm438, %v656
    %701 = vst.msk [vmem:[%s695 + $0x88] sm:$0xff] %vm438, %v658
    %702 = vst.msk [vmem:[%s695 + $0xc0] sm:$0xff] %vm438, %v660
    %703 = vst.msk [vmem:[%s695 + $0xc8] sm:$0xff] %vm438, %v662
    %704 = vst.msk [vmem:[%s695 + $0x100] sm:$0xff] %vm438, %v664
    %705 = vst.msk [vmem:[%s695 + $0x108] sm:$0xff] %vm438, %v666
    %706 = vst.msk [vmem:[%s695 + $0x140] sm:$0xff] %vm438, %v668
    %707 = vst.msk [vmem:[%s695 + $0x148] sm:$0xff] %vm438, %v670
    %708 = vst.msk [vmem:[%s695 + $0x180] sm:$0xff] %vm438, %v672
    %709 = vst.msk [vmem:[%s695 + $0x188] sm:$0xff] %vm438, %v674
    %710 = vst.msk [vmem:[%s695 + $0x1c0] sm:$0xff] %vm438, %v676
    %711 = vst.msk [vmem:[%s695 + $0x1c8] sm:$0xff] %vm438, %v678
    %v712 = vadd.f32 %v310, %v375
    %v713 = vadd.f32 %v311, %v377
    %v714 = vadd.f32 %v312, %v379
    %v715 = vadd.f32 %v313, %v381
    %v716 = vadd.f32 %v314, %v383
    %v717 = vadd.f32 %v315, %v385
    %v718 = vadd.f32 %v316, %v387
    %v719 = vadd.f32 %v317, %v389
    %v720 = vadd.f32 %v318, %v391
    %v721 = vadd.f32 %v319, %v393
    %v722 = vadd.f32 %v320, %v395
    %v723 = vadd.f32 %v321, %v397
    %v724 = vadd.f32 %v322, %v399
    %v725 = vadd.f32 %v323, %v401
    %v726 = vadd.f32 %v324, %v403
    %v727 = vadd.f32 %v325, %v405
    %v728 = vmul.f32 %v182, 0.0625
    %v729 = vmul.f32 %v183, 0.0625
    %v730 = vmul.f32 %v184, 0.0625
    %v731 = vmul.f32 %v185, 0.0625
    %v732 = vmul.f32 %v186, 0.0625
    %v733 = vmul.f32 %v187, 0.0625
    %v734 = vmul.f32 %v188, 0.0625
    %v735 = vmul.f32 %v189, 0.0625
    %v736 = vmul.f32 %v190, 0.0625
    %v737 = vmul.f32 %v191, 0.0625
    %v738 = vmul.f32 %v192, 0.0625
    %v739 = vmul.f32 %v193, 0.0625
    %v740 = vmul.f32 %v194, 0.0625
    %v741 = vmul.f32 %v195, 0.0625
    %v742 = vmul.f32 %v196, 0.0625
    %v743 = vmul.f32 %v197, 0.0625
    %v744 = vadd.f32 %v712, %v728
    %v745 = vadd.f32 %v713, %v729
    %v746 = vadd.f32 %v714, %v730
    %v747 = vadd.f32 %v715, %v731
    %v748 = vadd.f32 %v716, %v732
    %v749 = vadd.f32 %v717, %v733
    %v750 = vadd.f32 %v718, %v734
    %v751 = vadd.f32 %v719, %v735
    %v752 = vadd.f32 %v720, %v736
    %v753 = vadd.f32 %v721, %v737
    %v754 = vadd.f32 %v722, %v738
    %v755 = vadd.f32 %v723, %v739
    %v756 = vadd.f32 %v724, %v740
    %v757 = vadd.f32 %v725, %v741
    %v758 = vadd.f32 %v726, %v742
    %v759 = vadd.f32 %v727, %v743
    %v760 = vmul.f32 %v182, 0.1875
    %v761 = vmul.f32 %v183, 0.1875
    %v762 = vmul.f32 %v184, 0.1875
    %v763 = vmul.f32 %v185, 0.1875
    %v764 = vmul.f32 %v186, 0.1875
    %v765 = vmul.f32 %v187, 0.1875
    %v766 = vmul.f32 %v188, 0.1875
    %v767 = vmul.f32 %v189, 0.1875
    %v768 = vmul.f32 %v190, 0.1875
    %v769 = vmul.f32 %v191, 0.1875
    %v770 = vmul.f32 %v192, 0.1875
    %v771 = vmul.f32 %v193, 0.1875
    %v772 = vmul.f32 %v194, 0.1875
    %v773 = vmul.f32 %v195, 0.1875
    %v774 = vmul.f32 %v196, 0.1875
    %v775 = vmul.f32 %v197, 0.1875
    %792 = vrot.lane.b32.xlu0 %v760, 127
    %v793 = vpop.permute.xlu0 %792
    %794 = vrot.lane.b32.xlu0 %v761, 127
    %v795 = vpop.permute.xlu0 %794
    %796 = vrot.lane.b32.xlu0 %v762, 127
    %v797 = vpop.permute.xlu0 %796
    %798 = vrot.lane.b32.xlu0 %v763, 127
    %v799 = vpop.permute.xlu0 %798
    %800 = vrot.lane.b32.xlu0 %v764, 127
    %v801 = vpop.permute.xlu0 %800
    %802 = vrot.lane.b32.xlu0 %v765, 127
    %v803 = vpop.permute.xlu0 %802
    %804 = vrot.lane.b32.xlu0 %v766, 127
    %v805 = vpop.permute.xlu0 %804
    %806 = vrot.lane.b32.xlu0 %v767, 127
    %v807 = vpop.permute.xlu0 %806
    %808 = vrot.lane.b32.xlu0 %v768, 127
    %v809 = vpop.permute.xlu0 %808
    %810 = vrot.lane.b32.xlu0 %v769, 127
    %v811 = vpop.permute.xlu0 %810
    %812 = vrot.lane.b32.xlu0 %v770, 127
    %v813 = vpop.permute.xlu0 %812
    %814 = vrot.lane.b32.xlu0 %v771, 127
    %v815 = vpop.permute.xlu0 %814
    %816 = vrot.lane.b32.xlu0 %v772, 127
    %v817 = vpop.permute.xlu0 %816
    %818 = vrot.lane.b32.xlu0 %v773, 127
    %v819 = vpop.permute.xlu0 %818
    %820 = vrot.lane.b32.xlu0 %v774, 127
    %v821 = vpop.permute.xlu0 %820
    %822 = vrot.lane.b32.xlu0 %v775, 127
    %v823 = vpop.permute.xlu0 %822
    %v840 = vadd.f32 %v744, %v793
    %v841 = vadd.f32 %v745, %v795
    %v842 = vadd.f32 %v746, %v797
    %v843 = vadd.f32 %v747, %v799
    %v844 = vadd.f32 %v748, %v801
    %v845 = vadd.f32 %v749, %v803
    %v846 = vadd.f32 %v750, %v805
    %v847 = vadd.f32 %v751, %v807
    %v848 = vadd.f32 %v752, %v809
    %v849 = vadd.f32 %v753, %v811
    %v850 = vadd.f32 %v754, %v813
    %v851 = vadd.f32 %v755, %v815
    %v852 = vadd.f32 %v756, %v817
    %v853 = vadd.f32 %v757, %v819
    %v854 = vadd.f32 %v758, %v821
    %v855 = vadd.f32 %v759, %v823
    %s856 = scalar_lea.vmem [#allocation6], 32
    %857 = vst.msk [vmem:[%s856] sm:$0xff] %vm438, %v840
    %858 = vst.msk [vmem:[%s856 + $0x8] sm:$0xff] %vm438, %v841
    %859 = vst.msk [vmem:[%s856 + $0x40] sm:$0xff] %vm438, %v842
    %860 = vst.msk [vmem:[%s856 + $0x48] sm:$0xff] %vm438, %v843
    %861 = vst.msk [vmem:[%s856 + $0x80] sm:$0xff] %vm438, %v844
    %862 = vst.msk [vmem:[%s856 + $0x88] sm:$0xff] %vm438, %v845
    %863 = vst.msk [vmem:[%s856 + $0xc0] sm:$0xff] %vm438, %v846
    %864 = vst.msk [vmem:[%s856 + $0xc8] sm:$0xff] %vm438, %v847
    %865 = vst.msk [vmem:[%s856 + $0x100] sm:$0xff] %vm438, %v848
    %866 = vst.msk [vmem:[%s856 + $0x108] sm:$0xff] %vm438, %v849
    %867 = vst.msk [vmem:[%s856 + $0x140] sm:$0xff] %vm438, %v850
    %868 = vst.msk [vmem:[%s856 + $0x148] sm:$0xff] %vm438, %v851
    %869 = vst.msk [vmem:[%s856 + $0x180] sm:$0xff] %vm438, %v852
    %870 = vst.msk [vmem:[%s856 + $0x188] sm:$0xff] %vm438, %v853
    %871 = vst.msk [vmem:[%s856 + $0x1c0] sm:$0xff] %vm438, %v854
    %872 = vst.msk [vmem:[%s856 + $0x1c8] sm:$0xff] %vm438, %v855
    %v873 = vadd.f32 %v342, %v568
    %v874 = vadd.f32 %v343, %v570
    %v875 = vadd.f32 %v344, %v572
    %v876 = vadd.f32 %v345, %v574
    %v877 = vadd.f32 %v346, %v576
    %v878 = vadd.f32 %v347, %v578
    %v879 = vadd.f32 %v348, %v580
    %v880 = vadd.f32 %v349, %v582
    %v881 = vadd.f32 %v350, %v584
    %v882 = vadd.f32 %v351, %v586
    %v883 = vadd.f32 %v352, %v588
    %v884 = vadd.f32 %v353, %v590
    %v885 = vadd.f32 %v354, %v592
    %v886 = vadd.f32 %v355, %v594
    %v887 = vadd.f32 %v356, %v596
    %v888 = vadd.f32 %v357, %v598
    %v889 = vadd.f32 %v873, %v760
    %v890 = vadd.f32 %v874, %v761
    %v891 = vadd.f32 %v875, %v762
    %v892 = vadd.f32 %v876, %v763
    %v893 = vadd.f32 %v877, %v764
    %v894 = vadd.f32 %v878, %v765
    %v895 = vadd.f32 %v879, %v766
    %v896 = vadd.f32 %v880, %v767
    %v897 = vadd.f32 %v881, %v768
    %v898 = vadd.f32 %v882, %v769
    %v899 = vadd.f32 %v883, %v770
    %v900 = vadd.f32 %v884, %v771
    %v901 = vadd.f32 %v885, %v772
    %v902 = vadd.f32 %v886, %v773
    %v903 = vadd.f32 %v887, %v774
    %v904 = vadd.f32 %v888, %v775
    %921 = vrot.lane.b32.xlu0 %v728, 127
    %v922 = vpop.permute.xlu0 %921
    %923 = vrot.lane.b32.xlu0 %v729, 127
    %v924 = vpop.permute.xlu0 %923
    %925 = vrot.lane.b32.xlu0 %v730, 127
    %v926 = vpop.permute.xlu0 %925
    %927 = vrot.lane.b32.xlu0 %v731, 127
    %v928 = vpop.permute.xlu0 %927
    %929 = vrot.lane.b32.xlu0 %v732, 127
    %v930 = vpop.permute.xlu0 %929
    %931 = vrot.lane.b32.xlu0 %v733, 127
    %v932 = vpop.permute.xlu0 %931
    %933 = vrot.lane.b32.xlu0 %v734, 127
    %v934 = vpop.permute.xlu0 %933
    %935 = vrot.lane.b32.xlu0 %v735, 127
    %v936 = vpop.permute.xlu0 %935
    %937 = vrot.lane.b32.xlu0 %v736, 127
    %v938 = vpop.permute.xlu0 %937
    %939 = vrot.lane.b32.xlu0 %v737, 127
    %v940 = vpop.permute.xlu0 %939
    %941 = vrot.lane.b32.xlu0 %v738, 127
    %v942 = vpop.permute.xlu0 %941
    %943 = vrot.lane.b32.xlu0 %v739, 127
    %v944 = vpop.permute.xlu0 %943
    %945 = vrot.lane.b32.xlu0 %v740, 127
    %v946 = vpop.permute.xlu0 %945
    %947 = vrot.lane.b32.xlu0 %v741, 127
    %v948 = vpop.permute.xlu0 %947
    %949 = vrot.lane.b32.xlu0 %v742, 127
    %v950 = vpop.permute.xlu0 %949
    %951 = vrot.lane.b32.xlu0 %v743, 127
    %v952 = vpop.permute.xlu0 %951
    %v969 = vadd.f32 %v889, %v922
    %v970 = vadd.f32 %v890, %v924
    %v971 = vadd.f32 %v891, %v926
    %v972 = vadd.f32 %v892, %v928
    %v973 = vadd.f32 %v893, %v930
    %v974 = vadd.f32 %v894, %v932
    %v975 = vadd.f32 %v895, %v934
    %v976 = vadd.f32 %v896, %v936
    %v977 = vadd.f32 %v897, %v938
    %v978 = vadd.f32 %v898, %v940
    %v979 = vadd.f32 %v899, %v942
    %v980 = vadd.f32 %v900, %v944
    %v981 = vadd.f32 %v901, %v946
    %v982 = vadd.f32 %v902, %v948
    %v983 = vadd.f32 %v903, %v950
    %v984 = vadd.f32 %v904, %v952
    %1001 = vrot.lane.b32.xlu0 %v969, 127
    %v1002 = vpop.permute.xlu0 %1001
    %1003 = vrot.lane.b32.xlu0 %v970, 127
    %v1004 = vpop.permute.xlu0 %1003
    %1005 = vrot.lane.b32.xlu0 %v971, 127
    %v1006 = vpop.permute.xlu0 %1005
    %1007 = vrot.lane.b32.xlu0 %v972, 127
    %v1008 = vpop.permute.xlu0 %1007
    %1009 = vrot.lane.b32.xlu0 %v973, 127
    %v1010 = vpop.permute.xlu0 %1009
    %1011 = vrot.lane.b32.xlu0 %v974, 127
    %v1012 = vpop.permute.xlu0 %1011
    %1013 = vrot.lane.b32.xlu0 %v975, 127
    %v1014 = vpop.permute.xlu0 %1013
    %1015 = vrot.lane.b32.xlu0 %v976, 127
    %v1016 = vpop.permute.xlu0 %1015
    %1017 = vrot.lane.b32.xlu0 %v977, 127
    %v1018 = vpop.permute.xlu0 %1017
    %1019 = vrot.lane.b32.xlu0 %v978, 127
    %v1020 = vpop.permute.xlu0 %1019
    %1021 = vrot.lane.b32.xlu0 %v979, 127
    %v1022 = vpop.permute.xlu0 %1021
    %1023 = vrot.lane.b32.xlu0 %v980, 127
    %v1024 = vpop.permute.xlu0 %1023
    %1025 = vrot.lane.b32.xlu0 %v981, 127
    %v1026 = vpop.permute.xlu0 %1025
    %1027 = vrot.lane.b32.xlu0 %v982, 127
    %v1028 = vpop.permute.xlu0 %1027
    %1029 = vrot.lane.b32.xlu0 %v983, 127
    %v1030 = vpop.permute.xlu0 %1029
    %1031 = vrot.lane.b32.xlu0 %v984, 127
    %v1032 = vpop.permute.xlu0 %1031
    %s1049 = scalar_lea.vmem [#allocation6], 48
    %1050 = vst.msk [vmem:[%s1049] sm:$0xff] %vm438, %v1002
    %1051 = vst.msk [vmem:[%s1049 + $0x8] sm:$0xff] %vm438, %v1004
    %1052 = vst.msk [vmem:[%s1049 + $0x40] sm:$0xff] %vm438, %v1006
    %1053 = vst.msk [vmem:[%s1049 + $0x48] sm:$0xff] %vm438, %v1008
    %1054 = vst.msk [vmem:[%s1049 + $0x80] sm:$0xff] %vm438, %v1010
    %1055 = vst.msk [vmem:[%s1049 + $0x88] sm:$0xff] %vm438, %v1012
    %1056 = vst.msk [vmem:[%s1049 + $0xc0] sm:$0xff] %vm438, %v1014
    %1057 = vst.msk [vmem:[%s1049 + $0xc8] sm:$0xff] %vm438, %v1016
    %1058 = vst.msk [vmem:[%s1049 + $0x100] sm:$0xff] %vm438, %v1018
    %1059 = vst.msk [vmem:[%s1049 + $0x108] sm:$0xff] %vm438, %v1020
    %1060 = vst.msk [vmem:[%s1049 + $0x140] sm:$0xff] %vm438, %v1022
    %1061 = vst.msk [vmem:[%s1049 + $0x148] sm:$0xff] %vm438, %v1024
    %1062 = vst.msk [vmem:[%s1049 + $0x180] sm:$0xff] %vm438, %v1026
    %1063 = vst.msk [vmem:[%s1049 + $0x188] sm:$0xff] %vm438, %v1028
    %1064 = vst.msk [vmem:[%s1049 + $0x1c0] sm:$0xff] %vm438, %v1030
    %1065 = vst.msk [vmem:[%s1049 + $0x1c8] sm:$0xff] %vm438, %v1032
    // Predicated region
    $region14: #{tpu_custom_call.1} parent=1 // pred_check
      _
    $region15: #{tpu_custom_call.1} parent=1 // pred_check_branch
      %1067 = sbr.rel (0) target = $region17
    $region16: #{tpu_custom_call.1} parent=1 // pred_region
      %s1069 = ssub.s32 8192, 8192
      %1070 = vsyncadd [#allocation5], %s1069
      %s1071 = sshll.u32 [#allocation6], 4
      %s1072 = int_to_ptr.vmem [resolvable:$true] %s1071
      %1077 = dma.vmem_to_hbm [thread:$0]  %s1072, 8192, %s1, [#allocation5], 128, 128, 8
    $region17: #{tpu_custom_call.1} parent=1 // pred_fallthru
      _
    // Predicated region
    $region18: #{tpu_custom_call.1} parent=1 // pred_check
      _
    $region19: #{tpu_custom_call.1} parent=1 // pred_check_branch
      %1079 = sbr.rel (0) target = $region21
    $region20: #{tpu_custom_call.1} parent=1 // pred_region
      %1080 = dma.done [#allocation5], 8192
    $region21: #{tpu_custom_call.1} parent=1 // pred_fallthru
      _
    %1081 = vsyncpa [#allocation4], 1
    %1082 = vsyncpa [#allocation5], 1

</llo_original>
